<compile_context>
chip_gen: v5e
topology: v5e:2x2
jax: 0.10.0
libtpu: 0.0.40
codegen_flags: <defaults>
</compile_context>

<pallas_src>
import functools
import math

import numpy as np
import jax
import jax.numpy as jnp
from jax.experimental import pallas as pl
from jax.experimental.pallas import tpu as pltpu


# ---------------------------------------------------------------------------
# Kernel
# ---------------------------------------------------------------------------
def _kernel(x_ref, w_ref, pw_ref, bias_ref, o_ref, *, graphs_per_step,
            nodes_per_graph, inv_true_max_size):
    # x_ref   : (G * max_size_p, input_dim)  G graphs' padded node features, flattened
    # w_ref   : (input_dim, output_dim)      linear weight (transposed), grid-resident
    # pw_ref  : (max_size_p, output_dim)     prompt weight rows, grid-resident
    # bias_ref: (G, output_dim)              precomputed bias/mask term (f32)
    # o_ref   : (G, output_dim)              per-graph result (f32)
    h = jnp.dot(x_ref[...], w_ref[...], preferred_element_type=jnp.float32)
    h = h.reshape(graphs_per_step, nodes_per_graph, -1)       # (G, max_size_p, out)
    h = h * pw_ref[...].astype(jnp.float32)                   # broadcast over G (VPU)
    # cross-sublane sum -> XLU; the scale + bias add are free VPU filler
    o_ref[...] = (jnp.sum(h, axis=1) * inv_true_max_size
                  + bias_ref[...]).astype(o_ref.dtype)


# ---------------------------------------------------------------------------
# Block / VMEM sizing
# ---------------------------------------------------------------------------
def _tpu_vmem_capacity_bytes(default=128 << 20):
    try:
        return int(pltpu.get_tpu_info().vmem_capacity_bytes)
    except Exception:
        return default


def _choose_graphs_per_step(bsz, max_size_p, input_dim, output_dim, itemsize,
                            x_block_bytes=2 << 20, keep_two_steps=False):
    """Byte-targeted block sizing: this kernel is HBM-bound, so pick G by bytes."""
    # per-graph VMEM footprint: streamed x rows + the f32 h intermediate
    per_graph = max_size_p * input_dim * itemsize + max_size_p * output_dim * 4
    g = max(1, int(x_block_bytes) // max(1, per_graph))
    if keep_two_steps and bsz > 1:
        # v7x only (2 TensorCores): keep >= 2 "parallel" grid steps so both get work.
        g = min(g, pl.cdiv(bsz, 2))
    g = min(g, bsz)
    if g >= bsz:
        return int(bsz)                       # single full-extent block (always legal)
    g8 = (g // 8) * 8
    if g8 >= 8:
        # Prefer a multiple-of-8 divisor of bsz: no batch padding, no partial blocks.
        for cand in range(g8, 7, -8):
            if bsz % cand == 0:
                return int(cand)
        return int(g8)                        # partial last block; rows >= bsz dropped
    # Fewer than 8 graphs fit the byte target: keep sublane alignment anyway.
    return int(min(8, bsz))


def _vmem_limit_bytes(g, max_size_p, input_dim, output_dim, itemsize, capacity):
    x_blk = g * max_size_p * input_dim * itemsize
    w = input_dim * output_dim * itemsize
    pw = max_size_p * output_dim * itemsize
    h = g * max_size_p * output_dim * 4
    small = g * output_dim * 4
    # conservative: double-buffered x/bias/out, w+pw (even if single-buffered),
    # h intermediate + a reshape copy
    need = 2 * x_blk + 2 * (w + pw) + 2 * h + 4 * small
    limit = max(32 << 20, int(need * 3 // 2) + (4 << 20))
    return int(min(limit, capacity * 3 // 4))   # v7x: <= 48 MiB of 64 MiB physical


# ---------------------------------------------------------------------------
# Wrapper
# ---------------------------------------------------------------------------
def graph_prompt_weighted_matrix_linear(x_pad, mask, w_lin_T, b_lin, prompt_w_T,
                                        true_max_size, *, graphs_per_step=None,
                                        x_block_bytes=2 << 20):
    """Forward of graph_prompt_layer_weighted_matrix_linear.

    x_pad      : (bsz, max_size_p, input_dim) zero-padded raw node features.  Provide it
                 already in the streaming dtype (f32 or bf16); x is never cast here
                 (that would add a full HBM pass on the dominant operand).
    mask       : (bsz, max_size_p) 1.0 on real nodes (only used for the tiny bias term).
    w_lin_T    : (input_dim, output_dim)   == linear.weight.T
    b_lin      : (output_dim,)             == linear.bias
    prompt_w_T : (max_size_p, output_dim)  == self.weight.T[:max_size], zero-padded rows.
    true_max_size: torch `.mean(dim=1)` divisor (max graph size BEFORE 8-padding).
    """
    bsz, max_size_p, input_dim = x_pad.shape
    output_dim = w_lin_T.shape[1]
    inv_true = 1.0 / float(true_max_size)

    # Bias term folded into the kernel store (tiny, computed at f32 precision):
    #   mean_j[mask_j * b * pw_j] = b ⊙ (mask @ pw) / true_max_size -> (bsz, output_dim)
    bias_term = mask.astype(jnp.float32) @ prompt_w_T.astype(jnp.float32)
    bias_term = bias_term * b_lin.astype(jnp.float32)[None, :] * inv_true

    # Cast only the small resident params to x's streaming dtype.
    stream_dtype = x_pad.dtype
    w_lin_T = w_lin_T.astype(stream_dtype)
    prompt_w_T = prompt_w_T.astype(stream_dtype)
    itemsize = jnp.dtype(stream_dtype).itemsize

    capacity = _tpu_vmem_capacity_bytes()
    keep_two_steps = capacity <= (96 << 20)     # v7x-like: 64 MiB VMEM per TC, 2 TCs
    if graphs_per_step is None:
        graphs_per_step = _choose_graphs_per_step(
            bsz, max_size_p, input_dim, output_dim, itemsize,
            x_block_bytes=x_block_bytes, keep_two_steps=keep_two_steps)
    g = int(graphs_per_step)
    m_rows = g * max_size_p

    # Flatten graphs*nodes (metadata-only) so the kernel does one big 2-D matmul.
    x_flat = x_pad.reshape(bsz * max_size_p, input_dim)

    cost = pl.CostEstimate(
        flops=2 * bsz * max_size_p * input_dim * output_dim
              + 3 * bsz * max_size_p * output_dim,
        transcendentals=0,
        bytes_accessed=(x_flat.size * itemsize
                        + (w_lin_T.size + prompt_w_T.size) * itemsize
                        + 2 * bsz * output_dim * 4),
    )
    vmem_limit = _vmem_limit_bytes(g, max_size_p, input_dim, output_dim,
                                   itemsize, capacity)

    kernel = functools.partial(_kernel, graphs_per_step=g,
                               nodes_per_graph=max_size_p,
                               inv_true_max_size=inv_true)

    def build(single_buffer_resident):
        resident_kwargs = ({"pipeline_mode": pl.Buffered(1)}
                           if single_buffer_resident else {})
        return pl.pallas_call(
            kernel,
            out_shape=jax.ShapeDtypeStruct((bsz, output_dim), jnp.float32),
            grid_spec=pltpu.PrefetchScalarGridSpec(
                num_scalar_prefetch=0,
                grid=(pl.cdiv(bsz, g),),
                in_specs=[
                    pl.BlockSpec((m_rows, input_dim), lambda i: (i, 0)),
                    pl.BlockSpec((input_dim, output_dim), lambda i: (0, 0),
                                 **resident_kwargs),
                    pl.BlockSpec((max_size_p, output_dim), lambda i: (0, 0),
                                 **resident_kwargs),
                    pl.BlockSpec((g, output_dim), lambda i: (i, 0)),
                ],
                out_specs=pl.BlockSpec((g, output_dim), lambda i: (i, 0)),
            ),
            compiler_params=pltpu.CompilerParams(
                dimension_semantics=("parallel",),
                vmem_limit_bytes=vmem_limit,
            ),
            cost_estimate=cost,
        )

    # TODO(synk): for very large input_dim/output_dim, add N ("parallel") / K
    # ("arbitrary" + VMEM accumulator) grid axes instead of one resident w block.
    try:
        return build(True)(x_flat, w_lin_T, prompt_w_T, bias_term)
    except Exception:
        # pipeline_mode=pl.Buffered(1) rejected on this jax version: fall back to the
        # default double-buffering of the (small) resident operands.
        return build(False)(x_flat, w_lin_T, prompt_w_T, bias_term)


# ---------------------------------------------------------------------------
# Host-side glue (ragged split, like split_and_batchify_graph_feats)
# ---------------------------------------------------------------------------
def split_and_batchify(feats_np, graph_sizes, pad_to=None):
    """Ragged split -> zero-padded [bsz, padded, dim] + mask [bsz, padded]."""
    bsz = len(graph_sizes)
    dim = feats_np.shape[-1]
    max_size = max(graph_sizes)
    padded = max_size if pad_to is None else max(pad_to, max_size)
    out = np.zeros((bsz, padded, dim), dtype=feats_np.dtype)
    mask = np.zeros((bsz, padded), dtype=np.float32)
    off = 0
    for i, l in enumerate(graph_sizes):
        out[i, :l] = feats_np[off:off + l]
        mask[i, :l] = 1.0
        off += l
    return out, mask


if __name__ == "__main__":
    # Small shapes consistent with the module.
    max_n_num = 16
    input_dim = 32
    output_dim = 32
    graph_sizes = [10, 6, 7, 4, 13, 3, 12, 9, 5, 8, 11, 2, 14, 7, 10, 6]
    bsz = len(graph_sizes)
    total_nodes = sum(graph_sizes)
    max_size = max(graph_sizes)                    # torch .mean(dim=1) divisor
    max_size_p = -(-max_size // 8) * 8             # sublane-aligned node axis

    key = jax.random.PRNGKey(0)
    k_x, k_w, k_lw, k_lb = jax.random.split(key, 4)

    # --- deterministic parameter init (matches __init__ shapes) ---
    # self.weight : (output_dim, max_n_num), xavier_uniform
    bound_w = math.sqrt(6.0 / (output_dim + max_n_num))
    prompt_weight = jax.random.uniform(
        k_w, (output_dim, max_n_num), jnp.float32, -bound_w, bound_w)
    # nn.Linear(input_dim, output_dim): weight (output_dim, input_dim), bias (output_dim,)
    bound_l = 1.0 / math.sqrt(input_dim)
    lin_weight = jax.random.uniform(
        k_lw, (output_dim, input_dim), jnp.float32, -bound_l, bound_l)
    lin_bias = jax.random.uniform(
        k_lb, (output_dim,), jnp.float32, -bound_l, bound_l)

    # --- inputs ---
    graph_embedding = jax.random.normal(k_x, (total_nodes, input_dim), jnp.float32)

    # Glue: ragged split / pad (static sizes), node axis padded to a multiple of 8.
    x_pad_np, mask_np = split_and_batchify(
        np.asarray(graph_embedding), graph_sizes, pad_to=max_size_p)
    x_pad = jnp.asarray(x_pad_np)                  # (bsz, max_size_p, input_dim)
    mask = jnp.asarray(mask_np)                    # (bsz, max_size_p)

    # Kernel-friendly parameter layouts (glue).
    w_lin_T = lin_weight.T                         # (input_dim, output_dim)
    prompt_w_T = prompt_weight.T[:max_size]        # (max_size, output_dim)
    prompt_w_T_p = jnp.pad(prompt_w_T, ((0, max_size_p - max_size), (0, 0)))

    # f32 path.
    out = graph_prompt_weighted_matrix_linear(
        x_pad, mask, w_lin_T, lin_bias, prompt_w_T_p, max_size)
    out = jax.block_until_ready(out)

    # bf16-streaming path: x is cast at the *source* (producer), not in the wrapper.
    x_pad_bf16 = x_pad.astype(jnp.bfloat16)
    out_bf16 = graph_prompt_weighted_matrix_linear(
        x_pad_bf16, mask, w_lin_T, lin_bias, prompt_w_T_p, max_size)
    out_bf16 = jax.block_until_ready(out_bf16)

    # Pure-JAX reference of the PyTorch forward.
    h_all = graph_embedding @ lin_weight.T + lin_bias              # linear on all nodes
    h_pad_ref_np, _ = split_and_batchify(np.asarray(h_all), graph_sizes)  # pad to max_size
    ref = jnp.mean(jnp.asarray(h_pad_ref_np) * prompt_w_T[None, :, :], axis=1)

    assert out.shape == (bsz, output_dim)
    assert jnp.allclose(out, ref, atol=1e-4, rtol=1e-4)
    assert jnp.allclose(out_bf16, ref, atol=1e-2, rtol=1e-2)

    print("KERNEL_OK")
</pallas_src>

<mosaic_0001>
module attributes {stable_mosaic.version = 11 : i64} {
  func.func @_kernel(%arg0: i32, %arg1: memref<256x32xf32, #tpu.memory_space<vmem>>, %arg2: memref<32x32xf32, #tpu.memory_space<vmem>>, %arg3: memref<16x32xf32, #tpu.memory_space<vmem>>, %arg4: memref<16x32xf32, #tpu.memory_space<vmem>>, %arg5: memref<16x32xf32, #tpu.memory_space<vmem>>) attributes {dimension_semantics = [#tpu.dimension_semantics<parallel>], iteration_bounds = array<i64: 1>, scalar_prefetch = 0 : i64, scratch_operands = 0 : i64, tpu.core_type = #tpu.core_type<tc>, window_params = [{transform_indices = @transform_0, window_bounds = array<i64: 256, 32>}, {pipeline_mode = #tpu.pipeline_mode<synchronous>, transform_indices = @transform_1, window_bounds = array<i64: 32, 32>}, {pipeline_mode = #tpu.pipeline_mode<synchronous>, transform_indices = @transform_2, window_bounds = array<i64: 16, 32>}, {transform_indices = @transform_3, window_bounds = array<i64: 16, 32>}, {transform_indices = @transform_4, window_bounds = array<i64: 16, 32>}]} {
    %c0 = arith.constant 0 : index
    %c0_0 = arith.constant 0 : index
    %0 = vector.load %arg1[%c0, %c0_0] : memref<256x32xf32, #tpu.memory_space<vmem>>, vector<256x32xf32>
    %c0_1 = arith.constant 0 : index
    %c0_2 = arith.constant 0 : index
    %1 = vector.load %arg2[%c0_1, %c0_2] : memref<32x32xf32, #tpu.memory_space<vmem>>, vector<32x32xf32>
    %cst = arith.constant dense<0.000000e+00> : vector<256x32xf32>
    %2 = tpu.matmul %0, %1, %cst {dimension_numbers = #tpu.dot_dimension_numbers<[1], [0], [0], [1], [0, 0, 1, 1], [], []>} : vector<256x32xf32>, vector<32x32xf32>, vector<256x32xf32> -> vector<256x32xf32>
    %3 = vector.shape_cast %2 : vector<256x32xf32> to vector<16x16x32xf32>
    %c0_3 = arith.constant 0 : index
    %c0_4 = arith.constant 0 : index
    %4 = vector.load %arg3[%c0_3, %c0_4] : memref<16x32xf32, #tpu.memory_space<vmem>>, vector<16x32xf32>
    %5 = vector.shape_cast %4 : vector<16x32xf32> to vector<1x16x32xf32>
    %6 = vector.broadcast %5 : vector<1x16x32xf32> to vector<16x16x32xf32>
    %7 = arith.mulf %3, %6 : vector<16x16x32xf32>
    %cst_5 = arith.constant dense<0.000000e+00> : vector<16x32xf32>
    %8 = vector.multi_reduction <add>, %7, %cst_5 [1] : vector<16x16x32xf32> to vector<16x32xf32>
    %cst_6 = arith.constant 0.0714285746 : f32
    %9 = vector.broadcast %cst_6 : f32 to vector<16x32xf32>
    %10 = arith.mulf %8, %9 : vector<16x32xf32>
    %c0_7 = arith.constant 0 : index
    %c0_8 = arith.constant 0 : index
    %11 = vector.load %arg4[%c0_7, %c0_8] : memref<16x32xf32, #tpu.memory_space<vmem>>, vector<16x32xf32>
    %12 = arith.addf %10, %11 : vector<16x32xf32>
    %c0_9 = arith.constant 0 : index
    %c0_10 = arith.constant 0 : index
    %13 = vector.load %arg5[%c0_9, %c0_10] : memref<16x32xf32, #tpu.memory_space<vmem>>, vector<16x32xf32>
    tpu.vector_store %arg5[%c0_9, %c0_10], %12 {strides = array<i32>} : memref<16x32xf32, #tpu.memory_space<vmem>>, vector<16x32xf32>,
    return
  }
  func.func @transform_0(%arg0: i32) -> (i32, i32) {
    %c0_i32 = arith.constant 0 : i32
    %c0_i32_0 = arith.constant 0 : i32
    return %arg0, %c0_i32 : i32, i32
  }
  func.func @transform_1(%arg0: i32) -> (i32, i32) {
    %c0_i32 = arith.constant 0 : i32
    %c0_i32_0 = arith.constant 0 : i32
    %c0_i32_1 = arith.constant 0 : i32
    return %c0_i32, %c0_i32_0 : i32, i32
  }
  func.func @transform_2(%arg0: i32) -> (i32, i32) {
    %c0_i32 = arith.constant 0 : i32
    %c0_i32_0 = arith.constant 0 : i32
    %c0_i32_1 = arith.constant 0 : i32
    return %c0_i32, %c0_i32_0 : i32, i32
  }
  func.func @transform_3(%arg0: i32) -> (i32, i32) {
    %c0_i32 = arith.constant 0 : i32
    %c0_i32_0 = arith.constant 0 : i32
    return %arg0, %c0_i32 : i32, i32
  }
  func.func @transform_4(%arg0: i32) -> (i32, i32) {
    %c0_i32 = arith.constant 0 : i32
    %c0_i32_0 = arith.constant 0 : i32
    return %arg0, %c0_i32 : i32, i32
  }
}

module attributes {stable_mosaic.version = 11 : i64} {
  func.func @_kernel(%arg0: i32, %arg1: memref<256x32xf32, #tpu.memory_space<vmem>>, %arg2: memref<32x32xf32, #tpu.memory_space<vmem>>, %arg3: memref<16x32xf32, #tpu.memory_space<vmem>>, %arg4: memref<16x32xf32, #tpu.memory_space<vmem>>, %arg5: memref<16x32xf32, #tpu.memory_space<vmem>>) attributes {dimension_semantics = [#tpu.dimension_semantics<parallel>], iteration_bounds = array<i64: 1>, scalar_prefetch = 0 : i64, scratch_operands = 0 : i64, tpu.core_type = #tpu.core_type<tc>, window_params = [{transform_indices = @transform_0, window_bounds = array<i64: 256, 32>}, {pipeline_mode = #tpu.pipeline_mode<synchronous>, transform_indices = @transform_1, window_bounds = array<i64: 32, 32>}, {pipeline_mode = #tpu.pipeline_mode<synchronous>, transform_indices = @transform_2, window_bounds = array<i64: 16, 32>}, {transform_indices = @transform_3, window_bounds = array<i64: 16, 32>}, {transform_indices = @transform_4, window_bounds = array<i64: 16, 32>}]} {
    %c0 = arith.constant 0 : index
    %c0_0 = arith.constant 0 : index
    %0 = vector.load %arg1[%c0, %c0_0] : memref<256x32xf32, #tpu.memory_space<vmem>>, vector<256x32xf32>
    %c0_1 = arith.constant 0 : index
    %c0_2 = arith.constant 0 : index
    %1 = vector.load %arg2[%c0_1, %c0_2] : memref<32x32xf32, #tpu.memory_space<vmem>>, vector<32x32xf32>
    %cst = arith.constant dense<0.000000e+00> : vector<256x32xf32>
    %2 = tpu.matmul %0, %1, %cst {dimension_numbers = #tpu.dot_dimension_numbers<[1], [0], [0], [1], [0, 0, 1, 1], [], []>} : vector<256x32xf32>, vector<32x32xf32>, vector<256x32xf32> -> vector<256x32xf32>
    %3 = vector.shape_cast %2 : vector<256x32xf32> to vector<16x16x32xf32>
    %c0_3 = arith.constant 0 : index
    %c0_4 = arith.constant 0 : index
    %4 = vector.load %arg3[%c0_3, %c0_4] : memref<16x32xf32, #tpu.memory_space<vmem>>, vector<16x32xf32>
    %5 = vector.shape_cast %4 : vector<16x32xf32> to vector<1x16x32xf32>
    %6 = vector.broadcast %5 : vector<1x16x32xf32> to vector<16x16x32xf32>
    %7 = arith.mulf %3, %6 : vector<16x16x32xf32>
    %cst_5 = arith.constant dense<0.000000e+00> : vector<16x32xf32>
    %8 = vector.multi_reduction <add>, %7, %cst_5 [1] : vector<16x16x32xf32> to vector<16x32xf32>
    %cst_6 = arith.constant 0.0714285746 : f32
    %9 = vector.broadcast %cst_6 : f32 to vector<16x32xf32>
    %10 = arith.mulf %8, %9 : vector<16x32xf32>
    %c0_7 = arith.constant 0 : index
    %c0_8 = arith.constant 0 : index
    %11 = vector.load %arg4[%c0_7, %c0_8] : memref<16x32xf32, #tpu.memory_space<vmem>>, vector<16x32xf32>
    %12 = arith.addf %10, %11 : vector<16x32xf32>
    %c0_9 = arith.constant 0 : index
    %c0_10 = arith.constant 0 : index
    %13 = vector.load %arg5[%c0_9, %c0_10] : memref<16x32xf32, #tpu.memory_space<vmem>>, vector<16x32xf32>
    tpu.vector_store %arg5[%c0_9, %c0_10], %12 {strides = array<i32>} : memref<16x32xf32, #tpu.memory_space<vmem>>, vector<16x32xf32>,
    return
  }
  func.func @transform_0(%arg0: i32) -> (i32, i32) {
    %c0_i32 = arith.constant 0 : i32
    %c0_i32_0 = arith.constant 0 : i32
    return %arg0, %c0_i32 : i32, i32
  }
  func.func @transform_1(%arg0: i32) -> (i32, i32) {
    %c0_i32 = arith.constant 0 : i32
    %c0_i32_0 = arith.constant 0 : i32
    %c0_i32_1 = arith.constant 0 : i32
    return %c0_i32, %c0_i32_0 : i32, i32
  }
  func.func @transform_2(%arg0: i32) -> (i32, i32) {
    %c0_i32 = arith.constant 0 : i32
    %c0_i32_0 = arith.constant 0 : i32
    %c0_i32_1 = arith.constant 0 : i32
    return %c0_i32, %c0_i32_0 : i32, i32
  }
  func.func @transform_3(%arg0: i32) -> (i32, i32) {
    %c0_i32 = arith.constant 0 : i32
    %c0_i32_0 = arith.constant 0 : i32
    return %arg0, %c0_i32 : i32, i32
  }
  func.func @transform_4(%arg0: i32) -> (i32, i32) {
    %c0_i32 = arith.constant 0 : i32
    %c0_i32_0 = arith.constant 0 : i32
    return %arg0, %c0_i32 : i32, i32
  }
}

</mosaic_0001>

<llo_original>
// kernel: tpu_custom_call.1
$region0: #{tpu_custom_call.1}
  #allocation0 [shape = 'u32[]', space=smem, size = 0x4, offset = 0x4, fixed_abs, tag = 'smem constant byte address 0x4 - core index']
  #allocation1 [shape = 'u32[72,128]{1,0:T(1,128)}', space=vmem, size = 0x9000, scoped, tag = 'internal scratch']
  %s0 = inlined_call_operand.vmem [shape: f32[256,32], index: 0, kind: input, shape index: {}]
  %s1 = inlined_call_operand.vmem [shape: f32[32,32], index: 1, kind: input, shape index: {}]
  %s2 = inlined_call_operand.vmem [shape: f32[16,32], index: 2, kind: input, shape index: {}]
  %s3 = inlined_call_operand.vmem [shape: f32[16,32], index: 3, kind: input, shape index: {}]
  %s4 = inlined_call_operand.hbm [shape: f32[16,32], index: 4, kind: output, shape index: {}]
  %s5 = sld [smem:[#allocation0]]
  $region26: #{tpu_custom_call.1} parent=0
    _
  %s7 = ssub.s32 1, %s5
  %s8 = scalar_select 0, %s7, %s5
  $region1: #{tpu_custom_call.1} parent=0
    #allocation2 [shape = 'u8[8192]{0}', space=vmem, size = 0x2000, scoped, tag = 'output window, operand 0, single buffered']
    #allocation3 [shape = 's32[1]{0}', space=sflag, size = 0x4, scoped, tag = 'scoped memory for tpu_custom_call.1']
    %9 = vsyncpa [#allocation3], 0
    // Predicated region
    $region2: #{tpu_custom_call.1} parent=1 // pred_check
      _
    $region3: #{tpu_custom_call.1} parent=1 // pred_check_branch
      %11 = sbr.rel (0) target = $region5
    $region4: #{tpu_custom_call.1} parent=1 // pred_region
      _
    $region5: #{tpu_custom_call.1} parent=1 // pred_fallthru
      _
    // Predicated region
    $region6: #{tpu_custom_call.1} parent=1 // pred_check
      _
    $region7: #{tpu_custom_call.1} parent=1 // pred_check_branch
      %13 = sbr.rel (0) target = $region9
    $region8: #{tpu_custom_call.1} parent=1 // pred_region
      _
    $region9: #{tpu_custom_call.1} parent=1 // pred_fallthru
      _
    // Predicated region
    $region10: #{tpu_custom_call.1} parent=1 // pred_check
      _
    $region11: #{tpu_custom_call.1} parent=1 // pred_check_branch
      %15 = sbr.rel (0) target = $region13
    $region12: #{tpu_custom_call.1} parent=1 // pred_region
      _
    $region13: #{tpu_custom_call.1} parent=1 // pred_fallthru
      _
    // Predicated region
    $region14: #{tpu_custom_call.1} parent=1 // pred_check
      _
    $region15: #{tpu_custom_call.1} parent=1 // pred_check_branch
      %17 = sbr.rel (0) target = $region17
    $region16: #{tpu_custom_call.1} parent=1 // pred_region
      _
    $region17: #{tpu_custom_call.1} parent=1 // pred_fallthru
      _
    %v18 = vld [vmem:[%s0] sm:$0xff]
    %v19 = vld [vmem:[%s0 + $0x8] sm:$0xff]
    %v20 = vld [vmem:[%s0 + $0x10] sm:$0xff]
    %v21 = vld [vmem:[%s0 + $0x18] sm:$0xff]
    %v22 = vld [vmem:[%s0 + $0x20] sm:$0xff]
    %v23 = vld [vmem:[%s0 + $0x28] sm:$0xff]
    %v24 = vld [vmem:[%s0 + $0x30] sm:$0xff]
    %v25 = vld [vmem:[%s0 + $0x38] sm:$0xff]
    %v26 = vld [vmem:[%s0 + $0x40] sm:$0xff]
    %v27 = vld [vmem:[%s0 + $0x48] sm:$0xff]
    %v28 = vld [vmem:[%s0 + $0x50] sm:$0xff]
    %v29 = vld [vmem:[%s0 + $0x58] sm:$0xff]
    %v30 = vld [vmem:[%s0 + $0x60] sm:$0xff]
    %v31 = vld [vmem:[%s0 + $0x68] sm:$0xff]
    %v32 = vld [vmem:[%s0 + $0x70] sm:$0xff]
    %v33 = vld [vmem:[%s0 + $0x78] sm:$0xff]
    %v34 = vld [vmem:[%s0 + $0x80] sm:$0xff]
    %v35 = vld [vmem:[%s0 + $0x88] sm:$0xff]
    %v36 = vld [vmem:[%s0 + $0x90] sm:$0xff]
    %v37 = vld [vmem:[%s0 + $0x98] sm:$0xff]
    %v38 = vld [vmem:[%s0 + $0xa0] sm:$0xff]
    %v39 = vld [vmem:[%s0 + $0xa8] sm:$0xff]
    %v40 = vld [vmem:[%s0 + $0xb0] sm:$0xff]
    %v41 = vld [vmem:[%s0 + $0xb8] sm:$0xff]
    %v42 = vld [vmem:[%s0 + $0xc0] sm:$0xff]
    %v43 = vld [vmem:[%s0 + $0xc8] sm:$0xff]
    %v44 = vld [vmem:[%s0 + $0xd0] sm:$0xff]
    %v45 = vld [vmem:[%s0 + $0xd8] sm:$0xff]
    %v46 = vld [vmem:[%s0 + $0xe0] sm:$0xff]
    %v47 = vld [vmem:[%s0 + $0xe8] sm:$0xff]
    %v48 = vld [vmem:[%s0 + $0xf0] sm:$0xff]
    %v49 = vld [vmem:[%s0 + $0xf8] sm:$0xff]
    %v50 = vld [vmem:[%s1] sm:$0xff]
    %v51 = vld [vmem:[%s1 + $0x8] sm:$0xff]
    %v52 = vld [vmem:[%s1 + $0x10] sm:$0xff]
    %v53 = vld [vmem:[%s1 + $0x18] sm:$0xff]
    %vm54 = vcmask 261120
    %v56 = vsel %vm54, %v18, 0
    %v59 = vsel %vm54, %v19, 0
    %v62 = vsel %vm54, %v20, 0
    %v65 = vsel %vm54, %v21, 0
    %v68 = vsel %vm54, %v22, 0
    %v71 = vsel %vm54, %v23, 0
    %v74 = vsel %vm54, %v24, 0
    %v77 = vsel %vm54, %v25, 0
    %v80 = vsel %vm54, %v26, 0
    %v83 = vsel %vm54, %v27, 0
    %v86 = vsel %vm54, %v28, 0
    %v89 = vsel %vm54, %v29, 0
    %v92 = vsel %vm54, %v30, 0
    %v95 = vsel %vm54, %v31, 0
    %v98 = vsel %vm54, %v32, 0
    %v101 = vsel %vm54, %v33, 0
    %v104 = vsel %vm54, %v34, 0
    %v107 = vsel %vm54, %v35, 0
    %v110 = vsel %vm54, %v36, 0
    %v113 = vsel %vm54, %v37, 0
    %v116 = vsel %vm54, %v38, 0
    %v119 = vsel %vm54, %v39, 0
    %v122 = vsel %vm54, %v40, 0
    %v125 = vsel %vm54, %v41, 0
    %v128 = vsel %vm54, %v42, 0
    %v131 = vsel %vm54, %v43, 0
    %v134 = vsel %vm54, %v44, 0
    %v137 = vsel %vm54, %v45, 0
    %v140 = vsel %vm54, %v46, 0
    %v143 = vsel %vm54, %v47, 0
    %v146 = vsel %vm54, %v48, 0
    %v149 = vsel %vm54, %v49, 0
    %151 = vmatpush.msra.mxu0 0.0
    %152 = vmatpush.msra.mxu0 0.0
    %153 = vmatpush.msra.mxu0 0.0
    %154 = vmatpush.msra.mxu0 0.0
    %155 = vmatpush.msra.mxu0 0.0
    %156 = vmatpush.msra.mxu0 0.0
    %157 = vmatpush.msra.mxu0 0.0
    %158 = vmatpush.msra.mxu0 0.0
    %159 = vmatpush.msra.mxu0 0.0
    %160 = vmatpush.msra.mxu0 0.0
    %161 = vmatpush.msra.mxu0 0.0
    %162 = vmatpush.msra.mxu0 0.0
    %163 = vmatpush.msra.mxu0 %v53
    %164 = vmatpush.msra.mxu0 %v52
    %165 = vmatpush.msra.mxu0 %v51
    %166 = vmatpush.msra.mxu0 %v50
    %167 = vmatmul.f32.gmra.mxu0 %v56
    %v168 = vpop.f32.mrf.mxu0
    %v169 = vadd.f32 0.0, %v168
    %170 = vmatmul.f32.gmra.mxu0 %v59
    %v171 = vpop.f32.mrf.mxu0
    %v172 = vadd.f32 0.0, %v171
    %173 = vmatmul.f32.gmra.mxu0 %v62
    %v174 = vpop.f32.mrf.mxu0
    %v175 = vadd.f32 0.0, %v174
    %176 = vmatmul.f32.gmra.mxu0 %v65
    %v177 = vpop.f32.mrf.mxu0
    %v178 = vadd.f32 0.0, %v177
    %179 = vmatmul.f32.gmra.mxu0 %v68
    %v180 = vpop.f32.mrf.mxu0
    %v181 = vadd.f32 0.0, %v180
    %182 = vmatmul.f32.gmra.mxu0 %v71
    %v183 = vpop.f32.mrf.mxu0
    %v184 = vadd.f32 0.0, %v183
    %185 = vmatmul.f32.gmra.mxu0 %v74
    %v186 = vpop.f32.mrf.mxu0
    %v187 = vadd.f32 0.0, %v186
    %188 = vmatmul.f32.gmra.mxu0 %v77
    %v189 = vpop.f32.mrf.mxu0
    %v190 = vadd.f32 0.0, %v189
    %191 = vmatmul.f32.gmra.mxu0 %v80
    %v192 = vpop.f32.mrf.mxu0
    %v193 = vadd.f32 0.0, %v192
    %194 = vmatmul.f32.gmra.mxu0 %v83
    %v195 = vpop.f32.mrf.mxu0
    %v196 = vadd.f32 0.0, %v195
    %197 = vmatmul.f32.gmra.mxu0 %v86
    %v198 = vpop.f32.mrf.mxu0
    %v199 = vadd.f32 0.0, %v198
    %200 = vmatmul.f32.gmra.mxu0 %v89
    %v201 = vpop.f32.mrf.mxu0
    %v202 = vadd.f32 0.0, %v201
    %203 = vmatmul.f32.gmra.mxu0 %v92
    %v204 = vpop.f32.mrf.mxu0
    %v205 = vadd.f32 0.0, %v204
    %206 = vmatmul.f32.gmra.mxu0 %v95
    %v207 = vpop.f32.mrf.mxu0
    %v208 = vadd.f32 0.0, %v207
    %209 = vmatmul.f32.gmra.mxu0 %v98
    %v210 = vpop.f32.mrf.mxu0
    %v211 = vadd.f32 0.0, %v210
    %212 = vmatmul.f32.gmra.mxu0 %v101
    %v213 = vpop.f32.mrf.mxu0
    %v214 = vadd.f32 0.0, %v213
    %215 = vmatmul.f32.gmra.mxu0 %v104
    %v216 = vpop.f32.mrf.mxu0
    %v217 = vadd.f32 0.0, %v216
    %218 = vmatmul.f32.gmra.mxu0 %v107
    %v219 = vpop.f32.mrf.mxu0
    %v220 = vadd.f32 0.0, %v219
    %221 = vmatmul.f32.gmra.mxu0 %v110
    %v222 = vpop.f32.mrf.mxu0
    %v223 = vadd.f32 0.0, %v222
    %224 = vmatmul.f32.gmra.mxu0 %v113
    %v225 = vpop.f32.mrf.mxu0
    %v226 = vadd.f32 0.0, %v225
    %227 = vmatmul.f32.gmra.mxu0 %v116
    %v228 = vpop.f32.mrf.mxu0
    %v229 = vadd.f32 0.0, %v228
    %230 = vmatmul.f32.gmra.mxu0 %v119
    %v231 = vpop.f32.mrf.mxu0
    %v232 = vadd.f32 0.0, %v231
    %233 = vmatmul.f32.gmra.mxu0 %v122
    %v234 = vpop.f32.mrf.mxu0
    %v235 = vadd.f32 0.0, %v234
    %236 = vmatmul.f32.gmra.mxu0 %v125
    %v237 = vpop.f32.mrf.mxu0
    %v238 = vadd.f32 0.0, %v237
    %239 = vmatmul.f32.gmra.mxu0 %v128
    %v240 = vpop.f32.mrf.mxu0
    %v241 = vadd.f32 0.0, %v240
    %242 = vmatmul.f32.gmra.mxu0 %v131
    %v243 = vpop.f32.mrf.mxu0
    %v244 = vadd.f32 0.0, %v243
    %245 = vmatmul.f32.gmra.mxu0 %v134
    %v246 = vpop.f32.mrf.mxu0
    %v247 = vadd.f32 0.0, %v246
    %248 = vmatmul.f32.gmra.mxu0 %v137
    %v249 = vpop.f32.mrf.mxu0
    %v250 = vadd.f32 0.0, %v249
    %251 = vmatmul.f32.gmra.mxu0 %v140
    %v252 = vpop.f32.mrf.mxu0
    %v253 = vadd.f32 0.0, %v252
    %254 = vmatmul.f32.gmra.mxu0 %v143
    %v255 = vpop.f32.mrf.mxu0
    %v256 = vadd.f32 0.0, %v255
    %257 = vmatmul.f32.gmra.mxu0 %v146
    %v258 = vpop.f32.mrf.mxu0
    %v259 = vadd.f32 0.0, %v258
    %260 = vmatmul.f32.gmra.mxu0 %v149
    %v261 = vpop.f32.mrf.mxu0
    %v262 = vadd.f32 0.0, %v261
    %263 = vdwg.mxu0
    %v264 = vld [vmem:[%s2] sm:$0xff]
    %v265 = vld [vmem:[%s2 + $0x8] sm:$0xff]
    %v266 = vmul.f32 %v169, %v264
    %v267 = vmul.f32 %v172, %v265
    %v268 = vmul.f32 %v175, %v264
    %v269 = vmul.f32 %v178, %v265
    %v270 = vmul.f32 %v181, %v264
    %v271 = vmul.f32 %v184, %v265
    %v272 = vmul.f32 %v187, %v264
    %v273 = vmul.f32 %v190, %v265
    %v274 = vmul.f32 %v193, %v264
    %v275 = vmul.f32 %v196, %v265
    %v276 = vmul.f32 %v199, %v264
    %v277 = vmul.f32 %v202, %v265
    %v278 = vmul.f32 %v205, %v264
    %v279 = vmul.f32 %v208, %v265
    %v280 = vmul.f32 %v211, %v264
    %v281 = vmul.f32 %v214, %v265
    %v282 = vmul.f32 %v217, %v264
    %v283 = vmul.f32 %v220, %v265
    %v284 = vmul.f32 %v223, %v264
    %v285 = vmul.f32 %v226, %v265
    %v286 = vmul.f32 %v229, %v264
    %v287 = vmul.f32 %v232, %v265
    %v288 = vmul.f32 %v235, %v264
    %v289 = vmul.f32 %v238, %v265
    %v290 = vmul.f32 %v241, %v264
    %v291 = vmul.f32 %v244, %v265
    %v292 = vmul.f32 %v247, %v264
    %v293 = vmul.f32 %v250, %v265
    %v294 = vmul.f32 %v253, %v264
    %v295 = vmul.f32 %v256, %v265
    %v296 = vmul.f32 %v259, %v264
    %v297 = vmul.f32 %v262, %v265
    %v298 = vsel %vm54, %v266, 0.0
    %v299 = vsel %vm54, %v267, 0.0
    %v300 = vadd.f32 %v298, %v299
    %v301 = vrot.slane %v300, 4
    %v302 = vadd.f32 %v300, %v301
    %v303 = vrot.slane %v302, 2
    %v304 = vadd.f32 %v302, %v303
    %v305 = vrot.slane %v304, 1
    %v306 = vadd.f32 %v304, %v305
    %v307 = vsel %vm54, %v268, 0.0
    %v308 = vsel %vm54, %v269, 0.0
    %v309 = vadd.f32 %v307, %v308
    %v310 = vrot.slane %v309, 4
    %v311 = vadd.f32 %v309, %v310
    %v312 = vrot.slane %v311, 2
    %v313 = vadd.f32 %v311, %v312
    %v314 = vrot.slane %v313, 1
    %v315 = vadd.f32 %v313, %v314
    %v316 = vsel %vm54, %v270, 0.0
    %v317 = vsel %vm54, %v271, 0.0
    %v318 = vadd.f32 %v316, %v317
    %v319 = vrot.slane %v318, 4
    %v320 = vadd.f32 %v318, %v319
    %v321 = vrot.slane %v320, 2
    %v322 = vadd.f32 %v320, %v321
    %v323 = vrot.slane %v322, 1
    %v324 = vadd.f32 %v322, %v323
    %v325 = vsel %vm54, %v272, 0.0
    %v326 = vsel %vm54, %v273, 0.0
    %v327 = vadd.f32 %v325, %v326
    %v328 = vrot.slane %v327, 4
    %v329 = vadd.f32 %v327, %v328
    %v330 = vrot.slane %v329, 2
    %v331 = vadd.f32 %v329, %v330
    %v332 = vrot.slane %v331, 1
    %v333 = vadd.f32 %v331, %v332
    %v334 = vsel %vm54, %v274, 0.0
    %v335 = vsel %vm54, %v275, 0.0
    %v336 = vadd.f32 %v334, %v335
    %v337 = vrot.slane %v336, 4
    %v338 = vadd.f32 %v336, %v337
    %v339 = vrot.slane %v338, 2
    %v340 = vadd.f32 %v338, %v339
    %v341 = vrot.slane %v340, 1
    %v342 = vadd.f32 %v340, %v341
    %v343 = vsel %vm54, %v276, 0.0
    %v344 = vsel %vm54, %v277, 0.0
    %v345 = vadd.f32 %v343, %v344
    %v346 = vrot.slane %v345, 4
    %v347 = vadd.f32 %v345, %v346
    %v348 = vrot.slane %v347, 2
    %v349 = vadd.f32 %v347, %v348
    %v350 = vrot.slane %v349, 1
    %v351 = vadd.f32 %v349, %v350
    %v352 = vsel %vm54, %v278, 0.0
    %v353 = vsel %vm54, %v279, 0.0
    %v354 = vadd.f32 %v352, %v353
    %v355 = vrot.slane %v354, 4
    %v356 = vadd.f32 %v354, %v355
    %v357 = vrot.slane %v356, 2
    %v358 = vadd.f32 %v356, %v357
    %v359 = vrot.slane %v358, 1
    %v360 = vadd.f32 %v358, %v359
    %v361 = vsel %vm54, %v280, 0.0
    %v362 = vsel %vm54, %v281, 0.0
    %v363 = vadd.f32 %v361, %v362
    %v364 = vrot.slane %v363, 4
    %v365 = vadd.f32 %v363, %v364
    %v366 = vrot.slane %v365, 2
    %v367 = vadd.f32 %v365, %v366
    %v368 = vrot.slane %v367, 1
    %v369 = vadd.f32 %v367, %v368
    %v370 = vsel %vm54, %v282, 0.0
    %v371 = vsel %vm54, %v283, 0.0
    %v372 = vadd.f32 %v370, %v371
    %v373 = vrot.slane %v372, 4
    %v374 = vadd.f32 %v372, %v373
    %v375 = vrot.slane %v374, 2
    %v376 = vadd.f32 %v374, %v375
    %v377 = vrot.slane %v376, 1
    %v378 = vadd.f32 %v376, %v377
    %v379 = vsel %vm54, %v284, 0.0
    %v380 = vsel %vm54, %v285, 0.0
    %v381 = vadd.f32 %v379, %v380
    %v382 = vrot.slane %v381, 4
    %v383 = vadd.f32 %v381, %v382
    %v384 = vrot.slane %v383, 2
    %v385 = vadd.f32 %v383, %v384
    %v386 = vrot.slane %v385, 1
    %v387 = vadd.f32 %v385, %v386
    %v388 = vsel %vm54, %v286, 0.0
    %v389 = vsel %vm54, %v287, 0.0
    %v390 = vadd.f32 %v388, %v389
    %v391 = vrot.slane %v390, 4
    %v392 = vadd.f32 %v390, %v391
    %v393 = vrot.slane %v392, 2
    %v394 = vadd.f32 %v392, %v393
    %v395 = vrot.slane %v394, 1
    %v396 = vadd.f32 %v394, %v395
    %v397 = vsel %vm54, %v288, 0.0
    %v398 = vsel %vm54, %v289, 0.0
    %v399 = vadd.f32 %v397, %v398
    %v400 = vrot.slane %v399, 4
    %v401 = vadd.f32 %v399, %v400
    %v402 = vrot.slane %v401, 2
    %v403 = vadd.f32 %v401, %v402
    %v404 = vrot.slane %v403, 1
    %v405 = vadd.f32 %v403, %v404
    %v406 = vsel %vm54, %v290, 0.0
    %v407 = vsel %vm54, %v291, 0.0
    %v408 = vadd.f32 %v406, %v407
    %v409 = vrot.slane %v408, 4
    %v410 = vadd.f32 %v408, %v409
    %v411 = vrot.slane %v410, 2
    %v412 = vadd.f32 %v410, %v411
    %v413 = vrot.slane %v412, 1
    %v414 = vadd.f32 %v412, %v413
    %v415 = vsel %vm54, %v292, 0.0
    %v416 = vsel %vm54, %v293, 0.0
    %v417 = vadd.f32 %v415, %v416
    %v418 = vrot.slane %v417, 4
    %v419 = vadd.f32 %v417, %v418
    %v420 = vrot.slane %v419, 2
    %v421 = vadd.f32 %v419, %v420
    %v422 = vrot.slane %v421, 1
    %v423 = vadd.f32 %v421, %v422
    %v424 = vsel %vm54, %v294, 0.0
    %v425 = vsel %vm54, %v295, 0.0
    %v426 = vadd.f32 %v424, %v425
    %v427 = vrot.slane %v426, 4
    %v428 = vadd.f32 %v426, %v427
    %v429 = vrot.slane %v428, 2
    %v430 = vadd.f32 %v428, %v429
    %v431 = vrot.slane %v430, 1
    %v432 = vadd.f32 %v430, %v431
    %v433 = vsel %vm54, %v296, 0.0
    %v434 = vsel %vm54, %v297, 0.0
    %v435 = vadd.f32 %v433, %v434
    %v436 = vrot.slane %v435, 4
    %v437 = vadd.f32 %v435, %v436
    %v438 = vrot.slane %v437, 2
    %v439 = vadd.f32 %v437, %v438
    %v440 = vrot.slane %v439, 1
    %v441 = vadd.f32 %v439, %v440
    %v442 = vmul.f32 %v306, 0.071428575
    %v443 = vmul.f32 %v315, 0.071428575
    %v444 = vmul.f32 %v324, 0.071428575
    %v445 = vmul.f32 %v333, 0.071428575
    %v446 = vmul.f32 %v342, 0.071428575
    %v447 = vmul.f32 %v351, 0.071428575
    %v448 = vmul.f32 %v360, 0.071428575
    %v449 = vmul.f32 %v369, 0.071428575
    %v450 = vmul.f32 %v378, 0.071428575
    %v451 = vmul.f32 %v387, 0.071428575
    %v452 = vmul.f32 %v396, 0.071428575
    %v453 = vmul.f32 %v405, 0.071428575
    %v454 = vmul.f32 %v414, 0.071428575
    %v455 = vmul.f32 %v423, 0.071428575
    %v456 = vmul.f32 %v432, 0.071428575
    %v457 = vmul.f32 %v441, 0.071428575
    %v458 = vld [vmem:[%s3] sm:$0xff]
    %v459 = vld [vmem:[%s3 + $0x8] sm:$0xff]
    %v462 = vrot.slane %v458, 1
    %v463 = vrot.slane %v458, 2
    %v464 = vrot.slane %v458, 3
    %v465 = vrot.slane %v458, 4
    %v466 = vrot.slane %v458, 5
    %v467 = vrot.slane %v458, 6
    %v468 = vrot.slane %v458, 7
    %v469 = vrot.slane %v459, 1
    %v470 = vrot.slane %v459, 2
    %v471 = vrot.slane %v459, 3
    %v472 = vrot.slane %v459, 4
    %v473 = vrot.slane %v459, 5
    %v474 = vrot.slane %v459, 6
    %v475 = vrot.slane %v459, 7
    %v492 = vadd.f32 %v442, %v458
    %v493 = vadd.f32 %v443, %v462
    %v494 = vadd.f32 %v444, %v463
    %v495 = vadd.f32 %v445, %v464
    %v496 = vadd.f32 %v446, %v465
    %v497 = vadd.f32 %v447, %v466
    %v498 = vadd.f32 %v448, %v467
    %v499 = vadd.f32 %v449, %v468
    %v500 = vadd.f32 %v450, %v459
    %v501 = vadd.f32 %v451, %v469
    %v502 = vadd.f32 %v452, %v470
    %v503 = vadd.f32 %v453, %v471
    %v504 = vadd.f32 %v454, %v472
    %v505 = vadd.f32 %v455, %v473
    %v506 = vadd.f32 %v456, %v474
    %v507 = vadd.f32 %v457, %v475
    %v524 = vrot.slane %v493, 7
    %vm525 = vcmask 1041409
    %v526 = vsel %vm525, %v524, %v492
    %v527 = vrot.slane %v494, 6
    %vm528 = vcmask 1042434
    %v529 = vsel %vm528, %v527, %v526
    %v530 = vrot.slane %v495, 5
    %vm531 = vcmask 1043459
    %v532 = vsel %vm531, %v530, %v529
    %v533 = vrot.slane %v496, 4
    %vm534 = vcmask 1044484
    %v535 = vsel %vm534, %v533, %v532
    %v536 = vrot.slane %v497, 3
    %vm537 = vcmask 1045509
    %v538 = vsel %vm537, %v536, %v535
    %v539 = vrot.slane %v498, 2
    %vm540 = vcmask 1046534
    %v541 = vsel %vm540, %v539, %v538
    %v542 = vrot.slane %v499, 1
    %vm543 = vcmask 1047559
    %v544 = vsel %vm543, %v542, %v541
    %v545 = vrot.slane %v501, 7
    %v546 = vsel %vm525, %v545, %v500
    %v547 = vrot.slane %v502, 6
    %v548 = vsel %vm528, %v547, %v546
    %v549 = vrot.slane %v503, 5
    %v550 = vsel %vm531, %v549, %v548
    %v551 = vrot.slane %v504, 4
    %v552 = vsel %vm534, %v551, %v550
    %v553 = vrot.slane %v505, 3
    %v554 = vsel %vm537, %v553, %v552
    %v555 = vrot.slane %v506, 2
    %v556 = vsel %vm540, %v555, %v554
    %v557 = vrot.slane %v507, 1
    %v558 = vsel %vm543, %v557, %v556
    %561 = vst.msk [vmem:[#allocation2] sm:$0xff] %vm54, %v544
    %562 = vst.msk [vmem:[#allocation2 + $0x8] sm:$0xff] %vm54, %v558
    // Predicated region
    $region18: #{tpu_custom_call.1} parent=1 // pred_check
      _
    $region19: #{tpu_custom_call.1} parent=1 // pred_check_branch
      %564 = sbr.rel (0) target = $region21
    $region20: #{tpu_custom_call.1} parent=1 // pred_region
      %566 = vsyncadd [#allocation3], 0
      %s567 = sshll.u32 [#allocation2], 4
      %s568 = int_to_ptr.vmem [resolvable:$true] %s567
      %s569 = sshll.u32 %s4, 4
      %s570 = int_to_ptr.hbm [resolvable:$true] %s569
      %575 = dma.vmem_to_hbm [thread:$0]  %s568, 256, %s570, [#allocation3], 128, 128, 8
    $region21: #{tpu_custom_call.1} parent=1 // pred_fallthru
      _
    // Predicated region
    $region22: #{tpu_custom_call.1} parent=1 // pred_check
      _
    $region23: #{tpu_custom_call.1} parent=1 // pred_check_branch
      %577 = sbr.rel (0) target = $region25
    $region24: #{tpu_custom_call.1} parent=1 // pred_region
      %579 = dma.done [#allocation3], 256
    $region25: #{tpu_custom_call.1} parent=1 // pred_fallthru
      _
    %580 = vsyncpa [#allocation3], 1

// kernel: tpu_custom_call.1
$region0: #{tpu_custom_call.1}
  #allocation0 [shape = 'u32[]', space=smem, size = 0x4, offset = 0x4, fixed_abs, tag = 'smem constant byte address 0x4 - core index']
  #allocation1 [shape = 'u32[72,128]{1,0:T(1,128)}', space=vmem, size = 0x9000, scoped, tag = 'internal scratch']
  %s0 = inlined_call_operand.vmem [shape: f32[256,32], index: 0, kind: input, shape index: {}]
  %s1 = inlined_call_operand.vmem [shape: f32[32,32], index: 1, kind: input, shape index: {}]
  %s2 = inlined_call_operand.vmem [shape: f32[16,32], index: 2, kind: input, shape index: {}]
  %s3 = inlined_call_operand.vmem [shape: f32[16,32], index: 3, kind: input, shape index: {}]
  %s4 = inlined_call_operand.hbm [shape: f32[16,32], index: 4, kind: output, shape index: {}]
  %s5 = sld [smem:[#allocation0]]
  $region26: #{tpu_custom_call.1} parent=0
    _
  %s7 = ssub.s32 1, %s5
  %s8 = scalar_select 0, %s7, %s5
  $region1: #{tpu_custom_call.1} parent=0
    #allocation2 [shape = 'u8[8192]{0}', space=vmem, size = 0x2000, scoped, tag = 'output window, operand 0, single buffered']
    #allocation3 [shape = 's32[1]{0}', space=sflag, size = 0x4, scoped, tag = 'scoped memory for tpu_custom_call.1']
    %9 = vsyncpa [#allocation3], 0
    // Predicated region
    $region2: #{tpu_custom_call.1} parent=1 // pred_check
      _
    $region3: #{tpu_custom_call.1} parent=1 // pred_check_branch
      %11 = sbr.rel (0) target = $region5
    $region4: #{tpu_custom_call.1} parent=1 // pred_region
      _
    $region5: #{tpu_custom_call.1} parent=1 // pred_fallthru
      _
    // Predicated region
    $region6: #{tpu_custom_call.1} parent=1 // pred_check
      _
    $region7: #{tpu_custom_call.1} parent=1 // pred_check_branch
      %13 = sbr.rel (0) target = $region9
    $region8: #{tpu_custom_call.1} parent=1 // pred_region
      _
    $region9: #{tpu_custom_call.1} parent=1 // pred_fallthru
      _
    // Predicated region
    $region10: #{tpu_custom_call.1} parent=1 // pred_check
      _
    $region11: #{tpu_custom_call.1} parent=1 // pred_check_branch
      %15 = sbr.rel (0) target = $region13
    $region12: #{tpu_custom_call.1} parent=1 // pred_region
      _
    $region13: #{tpu_custom_call.1} parent=1 // pred_fallthru
      _
    // Predicated region
    $region14: #{tpu_custom_call.1} parent=1 // pred_check
      _
    $region15: #{tpu_custom_call.1} parent=1 // pred_check_branch
      %17 = sbr.rel (0) target = $region17
    $region16: #{tpu_custom_call.1} parent=1 // pred_region
      _
    $region17: #{tpu_custom_call.1} parent=1 // pred_fallthru
      _
    %v18 = vld [vmem:[%s0] sm:$0xff]
    %v19 = vld [vmem:[%s0 + $0x8] sm:$0xff]
    %v20 = vld [vmem:[%s0 + $0x10] sm:$0xff]
    %v21 = vld [vmem:[%s0 + $0x18] sm:$0xff]
    %v22 = vld [vmem:[%s0 + $0x20] sm:$0xff]
    %v23 = vld [vmem:[%s0 + $0x28] sm:$0xff]
    %v24 = vld [vmem:[%s0 + $0x30] sm:$0xff]
    %v25 = vld [vmem:[%s0 + $0x38] sm:$0xff]
    %v26 = vld [vmem:[%s0 + $0x40] sm:$0xff]
    %v27 = vld [vmem:[%s0 + $0x48] sm:$0xff]
    %v28 = vld [vmem:[%s0 + $0x50] sm:$0xff]
    %v29 = vld [vmem:[%s0 + $0x58] sm:$0xff]
    %v30 = vld [vmem:[%s0 + $0x60] sm:$0xff]
    %v31 = vld [vmem:[%s0 + $0x68] sm:$0xff]
    %v32 = vld [vmem:[%s0 + $0x70] sm:$0xff]
    %v33 = vld [vmem:[%s0 + $0x78] sm:$0xff]
    %v34 = vld [vmem:[%s0 + $0x80] sm:$0xff]
    %v35 = vld [vmem:[%s0 + $0x88] sm:$0xff]
    %v36 = vld [vmem:[%s0 + $0x90] sm:$0xff]
    %v37 = vld [vmem:[%s0 + $0x98] sm:$0xff]
    %v38 = vld [vmem:[%s0 + $0xa0] sm:$0xff]
    %v39 = vld [vmem:[%s0 + $0xa8] sm:$0xff]
    %v40 = vld [vmem:[%s0 + $0xb0] sm:$0xff]
    %v41 = vld [vmem:[%s0 + $0xb8] sm:$0xff]
    %v42 = vld [vmem:[%s0 + $0xc0] sm:$0xff]
    %v43 = vld [vmem:[%s0 + $0xc8] sm:$0xff]
    %v44 = vld [vmem:[%s0 + $0xd0] sm:$0xff]
    %v45 = vld [vmem:[%s0 + $0xd8] sm:$0xff]
    %v46 = vld [vmem:[%s0 + $0xe0] sm:$0xff]
    %v47 = vld [vmem:[%s0 + $0xe8] sm:$0xff]
    %v48 = vld [vmem:[%s0 + $0xf0] sm:$0xff]
    %v49 = vld [vmem:[%s0 + $0xf8] sm:$0xff]
    %v50 = vld [vmem:[%s1] sm:$0xff]
    %v51 = vld [vmem:[%s1 + $0x8] sm:$0xff]
    %v52 = vld [vmem:[%s1 + $0x10] sm:$0xff]
    %v53 = vld [vmem:[%s1 + $0x18] sm:$0xff]
    %vm54 = vcmask 261120
    %v56 = vsel %vm54, %v18, 0
    %v59 = vsel %vm54, %v19, 0
    %v62 = vsel %vm54, %v20, 0
    %v65 = vsel %vm54, %v21, 0
    %v68 = vsel %vm54, %v22, 0
    %v71 = vsel %vm54, %v23, 0
    %v74 = vsel %vm54, %v24, 0
    %v77 = vsel %vm54, %v25, 0
    %v80 = vsel %vm54, %v26, 0
    %v83 = vsel %vm54, %v27, 0
    %v86 = vsel %vm54, %v28, 0
    %v89 = vsel %vm54, %v29, 0
    %v92 = vsel %vm54, %v30, 0
    %v95 = vsel %vm54, %v31, 0
    %v98 = vsel %vm54, %v32, 0
    %v101 = vsel %vm54, %v33, 0
    %v104 = vsel %vm54, %v34, 0
    %v107 = vsel %vm54, %v35, 0
    %v110 = vsel %vm54, %v36, 0
    %v113 = vsel %vm54, %v37, 0
    %v116 = vsel %vm54, %v38, 0
    %v119 = vsel %vm54, %v39, 0
    %v122 = vsel %vm54, %v40, 0
    %v125 = vsel %vm54, %v41, 0
    %v128 = vsel %vm54, %v42, 0
    %v131 = vsel %vm54, %v43, 0
    %v134 = vsel %vm54, %v44, 0
    %v137 = vsel %vm54, %v45, 0
    %v140 = vsel %vm54, %v46, 0
    %v143 = vsel %vm54, %v47, 0
    %v146 = vsel %vm54, %v48, 0
    %v149 = vsel %vm54, %v49, 0
    %151 = vmatpush.msra.mxu0 0.0
    %152 = vmatpush.msra.mxu0 0.0
    %153 = vmatpush.msra.mxu0 0.0
    %154 = vmatpush.msra.mxu0 0.0
    %155 = vmatpush.msra.mxu0 0.0
    %156 = vmatpush.msra.mxu0 0.0
    %157 = vmatpush.msra.mxu0 0.0
    %158 = vmatpush.msra.mxu0 0.0
    %159 = vmatpush.msra.mxu0 0.0
    %160 = vmatpush.msra.mxu0 0.0
    %161 = vmatpush.msra.mxu0 0.0
    %162 = vmatpush.msra.mxu0 0.0
    %163 = vmatpush.msra.mxu0 %v53
    %164 = vmatpush.msra.mxu0 %v52
    %165 = vmatpush.msra.mxu0 %v51
    %166 = vmatpush.msra.mxu0 %v50
    %167 = vmatmul.f32.gmra.mxu0 %v56
    %v168 = vpop.f32.mrf.mxu0
    %v169 = vadd.f32 0.0, %v168
    %170 = vmatmul.f32.gmra.mxu0 %v59
    %v171 = vpop.f32.mrf.mxu0
    %v172 = vadd.f32 0.0, %v171
    %173 = vmatmul.f32.gmra.mxu0 %v62
    %v174 = vpop.f32.mrf.mxu0
    %v175 = vadd.f32 0.0, %v174
    %176 = vmatmul.f32.gmra.mxu0 %v65
    %v177 = vpop.f32.mrf.mxu0
    %v178 = vadd.f32 0.0, %v177
    %179 = vmatmul.f32.gmra.mxu0 %v68
    %v180 = vpop.f32.mrf.mxu0
    %v181 = vadd.f32 0.0, %v180
    %182 = vmatmul.f32.gmra.mxu0 %v71
    %v183 = vpop.f32.mrf.mxu0
    %v184 = vadd.f32 0.0, %v183
    %185 = vmatmul.f32.gmra.mxu0 %v74
    %v186 = vpop.f32.mrf.mxu0
    %v187 = vadd.f32 0.0, %v186
    %188 = vmatmul.f32.gmra.mxu0 %v77
    %v189 = vpop.f32.mrf.mxu0
    %v190 = vadd.f32 0.0, %v189
    %191 = vmatmul.f32.gmra.mxu0 %v80
    %v192 = vpop.f32.mrf.mxu0
    %v193 = vadd.f32 0.0, %v192
    %194 = vmatmul.f32.gmra.mxu0 %v83
    %v195 = vpop.f32.mrf.mxu0
    %v196 = vadd.f32 0.0, %v195
    %197 = vmatmul.f32.gmra.mxu0 %v86
    %v198 = vpop.f32.mrf.mxu0
    %v199 = vadd.f32 0.0, %v198
    %200 = vmatmul.f32.gmra.mxu0 %v89
    %v201 = vpop.f32.mrf.mxu0
    %v202 = vadd.f32 0.0, %v201
    %203 = vmatmul.f32.gmra.mxu0 %v92
    %v204 = vpop.f32.mrf.mxu0
    %v205 = vadd.f32 0.0, %v204
    %206 = vmatmul.f32.gmra.mxu0 %v95
    %v207 = vpop.f32.mrf.mxu0
    %v208 = vadd.f32 0.0, %v207
    %209 = vmatmul.f32.gmra.mxu0 %v98
    %v210 = vpop.f32.mrf.mxu0
    %v211 = vadd.f32 0.0, %v210
    %212 = vmatmul.f32.gmra.mxu0 %v101
    %v213 = vpop.f32.mrf.mxu0
    %v214 = vadd.f32 0.0, %v213
    %215 = vmatmul.f32.gmra.mxu0 %v104
    %v216 = vpop.f32.mrf.mxu0
    %v217 = vadd.f32 0.0, %v216
    %218 = vmatmul.f32.gmra.mxu0 %v107
    %v219 = vpop.f32.mrf.mxu0
    %v220 = vadd.f32 0.0, %v219
    %221 = vmatmul.f32.gmra.mxu0 %v110
    %v222 = vpop.f32.mrf.mxu0
    %v223 = vadd.f32 0.0, %v222
    %224 = vmatmul.f32.gmra.mxu0 %v113
    %v225 = vpop.f32.mrf.mxu0
    %v226 = vadd.f32 0.0, %v225
    %227 = vmatmul.f32.gmra.mxu0 %v116
    %v228 = vpop.f32.mrf.mxu0
    %v229 = vadd.f32 0.0, %v228
    %230 = vmatmul.f32.gmra.mxu0 %v119
    %v231 = vpop.f32.mrf.mxu0
    %v232 = vadd.f32 0.0, %v231
    %233 = vmatmul.f32.gmra.mxu0 %v122
    %v234 = vpop.f32.mrf.mxu0
    %v235 = vadd.f32 0.0, %v234
    %236 = vmatmul.f32.gmra.mxu0 %v125
    %v237 = vpop.f32.mrf.mxu0
    %v238 = vadd.f32 0.0, %v237
    %239 = vmatmul.f32.gmra.mxu0 %v128
    %v240 = vpop.f32.mrf.mxu0
    %v241 = vadd.f32 0.0, %v240
    %242 = vmatmul.f32.gmra.mxu0 %v131
    %v243 = vpop.f32.mrf.mxu0
    %v244 = vadd.f32 0.0, %v243
    %245 = vmatmul.f32.gmra.mxu0 %v134
    %v246 = vpop.f32.mrf.mxu0
    %v247 = vadd.f32 0.0, %v246
    %248 = vmatmul.f32.gmra.mxu0 %v137
    %v249 = vpop.f32.mrf.mxu0
    %v250 = vadd.f32 0.0, %v249
    %251 = vmatmul.f32.gmra.mxu0 %v140
    %v252 = vpop.f32.mrf.mxu0
    %v253 = vadd.f32 0.0, %v252
    %254 = vmatmul.f32.gmra.mxu0 %v143
    %v255 = vpop.f32.mrf.mxu0
    %v256 = vadd.f32 0.0, %v255
    %257 = vmatmul.f32.gmra.mxu0 %v146
    %v258 = vpop.f32.mrf.mxu0
    %v259 = vadd.f32 0.0, %v258
    %260 = vmatmul.f32.gmra.mxu0 %v149
    %v261 = vpop.f32.mrf.mxu0
    %v262 = vadd.f32 0.0, %v261
    %263 = vdwg.mxu0
    %v264 = vld [vmem:[%s2] sm:$0xff]
    %v265 = vld [vmem:[%s2 + $0x8] sm:$0xff]
    %v266 = vmul.f32 %v169, %v264
    %v267 = vmul.f32 %v172, %v265
    %v268 = vmul.f32 %v175, %v264
    %v269 = vmul.f32 %v178, %v265
    %v270 = vmul.f32 %v181, %v264
    %v271 = vmul.f32 %v184, %v265
    %v272 = vmul.f32 %v187, %v264
    %v273 = vmul.f32 %v190, %v265
    %v274 = vmul.f32 %v193, %v264
    %v275 = vmul.f32 %v196, %v265
    %v276 = vmul.f32 %v199, %v264
    %v277 = vmul.f32 %v202, %v265
    %v278 = vmul.f32 %v205, %v264
    %v279 = vmul.f32 %v208, %v265
    %v280 = vmul.f32 %v211, %v264
    %v281 = vmul.f32 %v214, %v265
    %v282 = vmul.f32 %v217, %v264
    %v283 = vmul.f32 %v220, %v265
    %v284 = vmul.f32 %v223, %v264
    %v285 = vmul.f32 %v226, %v265
    %v286 = vmul.f32 %v229, %v264
    %v287 = vmul.f32 %v232, %v265
    %v288 = vmul.f32 %v235, %v264
    %v289 = vmul.f32 %v238, %v265
    %v290 = vmul.f32 %v241, %v264
    %v291 = vmul.f32 %v244, %v265
    %v292 = vmul.f32 %v247, %v264
    %v293 = vmul.f32 %v250, %v265
    %v294 = vmul.f32 %v253, %v264
    %v295 = vmul.f32 %v256, %v265
    %v296 = vmul.f32 %v259, %v264
    %v297 = vmul.f32 %v262, %v265
    %v298 = vsel %vm54, %v266, 0.0
    %v299 = vsel %vm54, %v267, 0.0
    %v300 = vadd.f32 %v298, %v299
    %v301 = vrot.slane %v300, 4
    %v302 = vadd.f32 %v300, %v301
    %v303 = vrot.slane %v302, 2
    %v304 = vadd.f32 %v302, %v303
    %v305 = vrot.slane %v304, 1
    %v306 = vadd.f32 %v304, %v305
    %v307 = vsel %vm54, %v268, 0.0
    %v308 = vsel %vm54, %v269, 0.0
    %v309 = vadd.f32 %v307, %v308
    %v310 = vrot.slane %v309, 4
    %v311 = vadd.f32 %v309, %v310
    %v312 = vrot.slane %v311, 2
    %v313 = vadd.f32 %v311, %v312
    %v314 = vrot.slane %v313, 1
    %v315 = vadd.f32 %v313, %v314
    %v316 = vsel %vm54, %v270, 0.0
    %v317 = vsel %vm54, %v271, 0.0
    %v318 = vadd.f32 %v316, %v317
    %v319 = vrot.slane %v318, 4
    %v320 = vadd.f32 %v318, %v319
    %v321 = vrot.slane %v320, 2
    %v322 = vadd.f32 %v320, %v321
    %v323 = vrot.slane %v322, 1
    %v324 = vadd.f32 %v322, %v323
    %v325 = vsel %vm54, %v272, 0.0
    %v326 = vsel %vm54, %v273, 0.0
    %v327 = vadd.f32 %v325, %v326
    %v328 = vrot.slane %v327, 4
    %v329 = vadd.f32 %v327, %v328
    %v330 = vrot.slane %v329, 2
    %v331 = vadd.f32 %v329, %v330
    %v332 = vrot.slane %v331, 1
    %v333 = vadd.f32 %v331, %v332
    %v334 = vsel %vm54, %v274, 0.0
    %v335 = vsel %vm54, %v275, 0.0
    %v336 = vadd.f32 %v334, %v335
    %v337 = vrot.slane %v336, 4
    %v338 = vadd.f32 %v336, %v337
    %v339 = vrot.slane %v338, 2
    %v340 = vadd.f32 %v338, %v339
    %v341 = vrot.slane %v340, 1
    %v342 = vadd.f32 %v340, %v341
    %v343 = vsel %vm54, %v276, 0.0
    %v344 = vsel %vm54, %v277, 0.0
    %v345 = vadd.f32 %v343, %v344
    %v346 = vrot.slane %v345, 4
    %v347 = vadd.f32 %v345, %v346
    %v348 = vrot.slane %v347, 2
    %v349 = vadd.f32 %v347, %v348
    %v350 = vrot.slane %v349, 1
    %v351 = vadd.f32 %v349, %v350
    %v352 = vsel %vm54, %v278, 0.0
    %v353 = vsel %vm54, %v279, 0.0
    %v354 = vadd.f32 %v352, %v353
    %v355 = vrot.slane %v354, 4
    %v356 = vadd.f32 %v354, %v355
    %v357 = vrot.slane %v356, 2
    %v358 = vadd.f32 %v356, %v357
    %v359 = vrot.slane %v358, 1
    %v360 = vadd.f32 %v358, %v359
    %v361 = vsel %vm54, %v280, 0.0
    %v362 = vsel %vm54, %v281, 0.0
    %v363 = vadd.f32 %v361, %v362
    %v364 = vrot.slane %v363, 4
    %v365 = vadd.f32 %v363, %v364
    %v366 = vrot.slane %v365, 2
    %v367 = vadd.f32 %v365, %v366
    %v368 = vrot.slane %v367, 1
    %v369 = vadd.f32 %v367, %v368
    %v370 = vsel %vm54, %v282, 0.0
    %v371 = vsel %vm54, %v283, 0.0
    %v372 = vadd.f32 %v370, %v371
    %v373 = vrot.slane %v372, 4
    %v374 = vadd.f32 %v372, %v373
    %v375 = vrot.slane %v374, 2
    %v376 = vadd.f32 %v374, %v375
    %v377 = vrot.slane %v376, 1
    %v378 = vadd.f32 %v376, %v377
    %v379 = vsel %vm54, %v284, 0.0
    %v380 = vsel %vm54, %v285, 0.0
    %v381 = vadd.f32 %v379, %v380
    %v382 = vrot.slane %v381, 4
    %v383 = vadd.f32 %v381, %v382
    %v384 = vrot.slane %v383, 2
    %v385 = vadd.f32 %v383, %v384
    %v386 = vrot.slane %v385, 1
    %v387 = vadd.f32 %v385, %v386
    %v388 = vsel %vm54, %v286, 0.0
    %v389 = vsel %vm54, %v287, 0.0
    %v390 = vadd.f32 %v388, %v389
    %v391 = vrot.slane %v390, 4
    %v392 = vadd.f32 %v390, %v391
    %v393 = vrot.slane %v392, 2
    %v394 = vadd.f32 %v392, %v393
    %v395 = vrot.slane %v394, 1
    %v396 = vadd.f32 %v394, %v395
    %v397 = vsel %vm54, %v288, 0.0
    %v398 = vsel %vm54, %v289, 0.0
    %v399 = vadd.f32 %v397, %v398
    %v400 = vrot.slane %v399, 4
    %v401 = vadd.f32 %v399, %v400
    %v402 = vrot.slane %v401, 2
    %v403 = vadd.f32 %v401, %v402
    %v404 = vrot.slane %v403, 1
    %v405 = vadd.f32 %v403, %v404
    %v406 = vsel %vm54, %v290, 0.0
    %v407 = vsel %vm54, %v291, 0.0
    %v408 = vadd.f32 %v406, %v407
    %v409 = vrot.slane %v408, 4
    %v410 = vadd.f32 %v408, %v409
    %v411 = vrot.slane %v410, 2
    %v412 = vadd.f32 %v410, %v411
    %v413 = vrot.slane %v412, 1
    %v414 = vadd.f32 %v412, %v413
    %v415 = vsel %vm54, %v292, 0.0
    %v416 = vsel %vm54, %v293, 0.0
    %v417 = vadd.f32 %v415, %v416
    %v418 = vrot.slane %v417, 4
    %v419 = vadd.f32 %v417, %v418
    %v420 = vrot.slane %v419, 2
    %v421 = vadd.f32 %v419, %v420
    %v422 = vrot.slane %v421, 1
    %v423 = vadd.f32 %v421, %v422
    %v424 = vsel %vm54, %v294, 0.0
    %v425 = vsel %vm54, %v295, 0.0
    %v426 = vadd.f32 %v424, %v425
    %v427 = vrot.slane %v426, 4
    %v428 = vadd.f32 %v426, %v427
    %v429 = vrot.slane %v428, 2
    %v430 = vadd.f32 %v428, %v429
    %v431 = vrot.slane %v430, 1
    %v432 = vadd.f32 %v430, %v431
    %v433 = vsel %vm54, %v296, 0.0
    %v434 = vsel %vm54, %v297, 0.0
    %v435 = vadd.f32 %v433, %v434
    %v436 = vrot.slane %v435, 4
    %v437 = vadd.f32 %v435, %v436
    %v438 = vrot.slane %v437, 2
    %v439 = vadd.f32 %v437, %v438
    %v440 = vrot.slane %v439, 1
    %v441 = vadd.f32 %v439, %v440
    %v442 = vmul.f32 %v306, 0.071428575
    %v443 = vmul.f32 %v315, 0.071428575
    %v444 = vmul.f32 %v324, 0.071428575
    %v445 = vmul.f32 %v333, 0.071428575
    %v446 = vmul.f32 %v342, 0.071428575
    %v447 = vmul.f32 %v351, 0.071428575
    %v448 = vmul.f32 %v360, 0.071428575
    %v449 = vmul.f32 %v369, 0.071428575
    %v450 = vmul.f32 %v378, 0.071428575
    %v451 = vmul.f32 %v387, 0.071428575
    %v452 = vmul.f32 %v396, 0.071428575
    %v453 = vmul.f32 %v405, 0.071428575
    %v454 = vmul.f32 %v414, 0.071428575
    %v455 = vmul.f32 %v423, 0.071428575
    %v456 = vmul.f32 %v432, 0.071428575
    %v457 = vmul.f32 %v441, 0.071428575
    %v458 = vld [vmem:[%s3] sm:$0xff]
    %v459 = vld [vmem:[%s3 + $0x8] sm:$0xff]
    %v462 = vrot.slane %v458, 1
    %v463 = vrot.slane %v458, 2
    %v464 = vrot.slane %v458, 3
    %v465 = vrot.slane %v458, 4
    %v466 = vrot.slane %v458, 5
    %v467 = vrot.slane %v458, 6
    %v468 = vrot.slane %v458, 7
    %v469 = vrot.slane %v459, 1
    %v470 = vrot.slane %v459, 2
    %v471 = vrot.slane %v459, 3
    %v472 = vrot.slane %v459, 4
    %v473 = vrot.slane %v459, 5
    %v474 = vrot.slane %v459, 6
    %v475 = vrot.slane %v459, 7
    %v492 = vadd.f32 %v442, %v458
    %v493 = vadd.f32 %v443, %v462
    %v494 = vadd.f32 %v444, %v463
    %v495 = vadd.f32 %v445, %v464
    %v496 = vadd.f32 %v446, %v465
    %v497 = vadd.f32 %v447, %v466
    %v498 = vadd.f32 %v448, %v467
    %v499 = vadd.f32 %v449, %v468
    %v500 = vadd.f32 %v450, %v459
    %v501 = vadd.f32 %v451, %v469
    %v502 = vadd.f32 %v452, %v470
    %v503 = vadd.f32 %v453, %v471
    %v504 = vadd.f32 %v454, %v472
    %v505 = vadd.f32 %v455, %v473
    %v506 = vadd.f32 %v456, %v474
    %v507 = vadd.f32 %v457, %v475
    %v524 = vrot.slane %v493, 7
    %vm525 = vcmask 1041409
    %v526 = vsel %vm525, %v524, %v492
    %v527 = vrot.slane %v494, 6
    %vm528 = vcmask 1042434
    %v529 = vsel %vm528, %v527, %v526
    %v530 = vrot.slane %v495, 5
    %vm531 = vcmask 1043459
    %v532 = vsel %vm531, %v530, %v529
    %v533 = vrot.slane %v496, 4
    %vm534 = vcmask 1044484
    %v535 = vsel %vm534, %v533, %v532
    %v536 = vrot.slane %v497, 3
    %vm537 = vcmask 1045509
    %v538 = vsel %vm537, %v536, %v535
    %v539 = vrot.slane %v498, 2
    %vm540 = vcmask 1046534
    %v541 = vsel %vm540, %v539, %v538
    %v542 = vrot.slane %v499, 1
    %vm543 = vcmask 1047559
    %v544 = vsel %vm543, %v542, %v541
    %v545 = vrot.slane %v501, 7
    %v546 = vsel %vm525, %v545, %v500
    %v547 = vrot.slane %v502, 6
    %v548 = vsel %vm528, %v547, %v546
    %v549 = vrot.slane %v503, 5
    %v550 = vsel %vm531, %v549, %v548
    %v551 = vrot.slane %v504, 4
    %v552 = vsel %vm534, %v551, %v550
    %v553 = vrot.slane %v505, 3
    %v554 = vsel %vm537, %v553, %v552
    %v555 = vrot.slane %v506, 2
    %v556 = vsel %vm540, %v555, %v554
    %v557 = vrot.slane %v507, 1
    %v558 = vsel %vm543, %v557, %v556
    %561 = vst.msk [vmem:[#allocation2] sm:$0xff] %vm54, %v544
    %562 = vst.msk [vmem:[#allocation2 + $0x8] sm:$0xff] %vm54, %v558
    // Predicated region
    $region18: #{tpu_custom_call.1} parent=1 // pred_check
      _
    $region19: #{tpu_custom_call.1} parent=1 // pred_check_branch
      %564 = sbr.rel (0) target = $region21
    $region20: #{tpu_custom_call.1} parent=1 // pred_region
      %566 = vsyncadd [#allocation3], 0
      %s567 = sshll.u32 [#allocation2], 4
      %s568 = int_to_ptr.vmem [resolvable:$true] %s567
      %s569 = sshll.u32 %s4, 4
      %s570 = int_to_ptr.hbm [resolvable:$true] %s569
      %575 = dma.vmem_to_hbm [thread:$0]  %s568, 256, %s570, [#allocation3], 128, 128, 8
    $region21: #{tpu_custom_call.1} parent=1 // pred_fallthru
      _
    // Predicated region
    $region22: #{tpu_custom_call.1} parent=1 // pred_check
      _
    $region23: #{tpu_custom_call.1} parent=1 // pred_check_branch
      %577 = sbr.rel (0) target = $region25
    $region24: #{tpu_custom_call.1} parent=1 // pred_region
      %579 = dma.done [#allocation3], 256
    $region25: #{tpu_custom_call.1} parent=1 // pred_fallthru
      _
    %580 = vsyncpa [#allocation3], 1

</llo_original>
